<compile_context>
chip_gen: v6e
topology: v6e:2x2x1
jax: 0.10.0
libtpu: 0.0.40
codegen_flags: <defaults>
</compile_context>

<pallas_src>
import functools

import jax
import jax.numpy as jnp
from jax.experimental import pallas as pl
from jax.experimental.pallas import tpu as pltpu


def dgc_kernel(y0_ref, a_ref, w_ref, o_ref):
    """One batch-group of the diffusion graph convolution.

    y0_ref: (1, n, Bg*d)              node-major folded input, column = b*d + f
    a_ref : (S, n, n)                 diffusion supports (resident across the grid)
    w_ref : (2S+1, Bg*d, Bg*out)      block-diagonal expanded projection weights
                                      w_ref[k, b*d+f, b*out+o] = W[f*(2S+1)+k, o]
    o_ref : (1, n, Bg*out)            float32 folded output block, column = b*out + o
    """
    n_supports = a_ref.shape[0]
    cd = y0_ref.dtype  # compute dtype (matmul operand dtype)

    y0 = y0_ref[0]                                              # (n, Bg*d)
    # Chebyshev order 0 feeds the projection immediately: every projection matmul is
    # a full-width (n, Bg*d) @ (Bg*d, Bg*out) MXU pass -- no staging scatter, no
    # masked stores, nothing but y0 / the current term / the accumulator stays live.
    acc = jnp.dot(y0, w_ref[0], preferred_element_type=jnp.float32)

    for s in range(n_supports):
        a_s = a_ref[s]                                          # (n, n)
        # order 1:  Y1 = A_s @ Y0     ( == (X0 @ A_s^T) in node-major folded form )
        y1 = jnp.dot(a_s, y0, preferred_element_type=jnp.float32).astype(cd)
        acc += jnp.dot(y1, w_ref[1 + 2 * s], preferred_element_type=jnp.float32)
        # order 2:  Y2 = 2 * A_s @ Y1 - Y0   (combine in f32, cast only for the MXU;
        # no hoisted f32 copy of Y0 is kept live across the support loop)
        y2 = (2.0 * jnp.dot(a_s, y1, preferred_element_type=jnp.float32)
              - y0.astype(jnp.float32)).astype(cd)
        acc += jnp.dot(y2, w_ref[2 + 2 * s], preferred_element_type=jnp.float32)

    o_ref[0] = acc.astype(o_ref.dtype)                          # full-block store


def diffusion_graph_convolution(A, X, W, *, compute_dtype=jnp.bfloat16,
                                batch_block=None):
    """A: (S, n, n) dense supports, X: (batch, d, n), W: ((2S+1)*d, out).

    Returns (batch, n, out) float32, matching the PyTorch module forward.
    NOTE: matmul operands are cast to `compute_dtype` (default bf16) with f32 MXU
    accumulation; pass compute_dtype=jnp.float32 for f32-faithful results.
    """
    # TODO(synk): the torch module uses torch.sparse.mm on sparse supports; A is
    # handled densely here (no sparse matmul primitive in Pallas TPU).
    # TODO(synk): only the batched (3-D X) path of the torch forward is implemented.
    batch, d, n = X.shape
    n_supports = A.shape[0]
    order = 2 * n_supports + 1
    assert A.shape == (n_supports, n, n)
    assert W.shape[0] == order * d
    out_features = W.shape[1]

    # ----------------- batch grouping -----------------
    if batch_block is None:
        # Largest divisor of batch such that:
        #  * num_groups >= 2 whenever batch >= 2 (so the "parallel" grid axis can be
        #    sharded across v7x's two TensorCores; no downside on v5e/v6e),
        #  * the folded lane width Bg*d stays <= ~1024 (v6e MXU sweet spot),
        #  * the block-diagonal weight expansion stays small.
        batch_block = 1
        for cand in range(1, batch + 1):
            if batch % cand:
                continue
            if batch >= 2 and batch // cand < 2:
                continue
            if cand * d > 1024:
                continue
            if order * (cand * d) * (cand * out_features) > (4 << 20):
                continue
            batch_block = cand
    assert 1 <= batch_block <= batch and batch % batch_block == 0
    bg = batch_block
    num_groups = batch // bg
    fold_in = bg * d
    fold_out = bg * out_features

    # ----------------- wrapper-side layout plumbing (plain XLA ops) -----------------
    # node-major, batch-folded per group:  y0f[g, i, b*d + f] = X[g*Bg + b, f, i]
    y0f = (X.reshape(num_groups, bg, d, n)
             .transpose(0, 3, 1, 2)
             .reshape(num_groups, n, fold_in)
             .astype(compute_dtype))
    a_c = A.astype(compute_dtype)
    # Regroup W rows (f*order + k) -> [k, f, o], then block-diagonal expand over the
    # batch group so the projection of a folded (n, Bg*d) term is one matmul:
    #   w_exp[k, b*d + f, c*out + o] = (b == c) * W[f*order + k, o]
    w3 = W.reshape(d, order, out_features).transpose(1, 0, 2)          # (order, d, out)
    eye = jnp.eye(bg, dtype=W.dtype)
    w_exp = (jnp.einsum('kfo,bc->kbfco', w3, eye)
               .reshape(order, fold_in, fold_out)
               .astype(compute_dtype))

    # ----------------- cost / VMEM bookkeeping -----------------
    dt_size = jnp.dtype(compute_dtype).itemsize
    flops = num_groups * (4 * n_supports * n * n * fold_in
                          + 2 * order * n * fold_in * fold_out)
    bytes_accessed = int(y0f.size * dt_size + a_c.size * dt_size
                         + w_exp.size * dt_size + num_groups * n * fold_out * 4)
    cost = pl.CostEstimate(flops=int(flops), transcendentals=0,
                           bytes_accessed=bytes_accessed)

    # Resident A / W_exp are counted twice (the pipeline may still double-buffer
    # constant-index-map blocks).
    # TODO(synk): pin A / W_exp to a single buffer (pipeline_mode=pl.Buffered(1)) and
    # tile A over its row dim when S*n*n*dt exceeds ~1/3 of VMEM (matters on v7x's
    # 64 MiB/TC); at these shapes the resident-A design fits comfortably.
    # TODO(synk): optionally store A in fp8 (e4m3) on v7x to halve its VMEM footprint.
    vmem_estimate = (
        2 * n * fold_in * dt_size                    # double-buffered Y0 block
        + 2 * n * fold_out * 4                       # double-buffered output block
        + 2 * n_supports * n * n * dt_size           # resident A (x2, see above)
        + 2 * order * fold_in * fold_out * dt_size   # resident W_exp (x2)
        + 6 * n * max(fold_in, fold_out) * 4)        # live f32 intermediates
    try:
        vmem_cap = int(pltpu.get_tpu_info().vmem_capacity_bytes)
    except Exception:
        vmem_cap = 64 * 1024 * 1024                  # conservative (v7x per-TC) fallback
    # Always set the scoped-VMEM limit (v5e default is ~16 MiB) with ~1.4x headroom,
    # clamped below physical capacity.  If the clamp binds, shrink batch_block.
    vmem_limit = int(min(int(0.9 * vmem_cap),
                         max(32 * 1024 * 1024, int(1.4 * vmem_estimate))))

    grid_spec = pltpu.PrefetchScalarGridSpec(
        num_scalar_prefetch=0,
        grid=(num_groups,),
        in_specs=[
            # Every block spans the full trailing dims -> always (8,128)-legal and
            # every load/store is a full-width, unmasked slab.
            pl.BlockSpec((1, n, fold_in), lambda g: (g, 0, 0)),            # Y0 group
            pl.BlockSpec((n_supports, n, n), lambda g: (0, 0, 0)),         # A (resident)
            pl.BlockSpec((order, fold_in, fold_out), lambda g: (0, 0, 0)),  # W (resident)
        ],
        out_specs=pl.BlockSpec((1, n, fold_out), lambda g: (g, 0, 0)),
    )

    out_folded = pl.pallas_call(
        dgc_kernel,
        out_shape=jax.ShapeDtypeStruct((num_groups, n, fold_out), jnp.float32),
        grid_spec=grid_spec,
        compiler_params=pltpu.CompilerParams(
            dimension_semantics=("parallel",),
            vmem_limit_bytes=vmem_limit),
        cost_estimate=cost,
    )(y0f, a_c, w_exp)

    # Un-fold (cheap XLA reshape/transpose): out_folded[g, i, b*out+o] -> (batch, n, out)
    out = (out_folded.reshape(num_groups, n, bg, out_features)
                     .transpose(0, 2, 1, 3)
                     .reshape(batch, n, out_features))
    return out


def reference(A, X, W):
    """Pure-JAX float32 replica of the PyTorch forward (dense A)."""
    batch, d, n = X.shape
    hp = "highest"
    X0 = X.reshape(batch * d, n)
    feats = [X0]
    for s in range(A.shape[0]):
        X1 = jnp.matmul(X0, A[s].T, precision=hp)
        feats.append(X1)
        X2 = 2.0 * jnp.matmul(X1, A[s].T, precision=hp) - X0
        feats.append(X2)
    order = len(feats)
    Xc = jnp.stack(feats, axis=2)                                # (B*d, n, order)
    Xc = Xc.reshape(batch, d, n, order).transpose(0, 2, 1, 3)    # (B, n, d, order)
    Xc = Xc.reshape(batch, n, order * d)
    return jnp.matmul(Xc, W, precision=hp)                       # (B, n, out)


def _make_inputs(key, batch, d, n, out_features):
    k1, k2, k3 = jax.random.split(key, 3)
    stdv = out_features ** -0.5
    W = jax.random.uniform(k1, (5 * d, out_features), minval=-stdv, maxval=stdv,
                           dtype=jnp.float32)
    A = jax.random.uniform(k2, (2, n, n), dtype=jnp.float32)
    A = A / jnp.sum(A, axis=-1, keepdims=True)   # random-walk-style normalization
    X = jax.random.normal(k3, (batch, d, n), dtype=jnp.float32)
    return A, X, W


def _rel_err(out, ref):
    return float(jnp.max(jnp.abs(out - ref)) / (jnp.max(jnp.abs(ref)) + 1e-12))


if __name__ == "__main__":
    key = jax.random.PRNGKey(0)
    k_a, k_b = jax.random.split(key)

    # Config 1/2: module-scale small shapes (batch=2, in_features=4, n=16, out=32).
    # Auto-picker gives batch_block=1 -> a 2-step "parallel" grid (v7x 2-TC friendly).
    A, X, W = _make_inputs(k_a, batch=2, d=4, n=16, out_features=32)
    ref = reference(A, X, W)

    run_f32 = jax.jit(functools.partial(diffusion_graph_convolution,
                                        compute_dtype=jnp.float32))
    out_f32 = jax.block_until_ready(run_f32(A, X, W))
    assert out_f32.shape == ref.shape
    assert bool(jnp.all(jnp.isfinite(out_f32)))
    # Typical observed error for the f32 path is ~1e-6; the bound is kept at 1e-3 only
    # to absorb MXU accumulation-order / precision-mode differences across TPU
    # generations.  Any W-regroup / folding-layout bug produces O(1) errors.
    assert _rel_err(out_f32, ref) < 1e-3, "f32 kernel mismatch vs reference"

    run_bf16 = jax.jit(functools.partial(diffusion_graph_convolution,
                                         compute_dtype=jnp.bfloat16))
    out_bf16 = jax.block_until_ready(run_bf16(A, X, W))
    assert _rel_err(out_bf16, ref) < 5e-2, "bf16 kernel mismatch vs reference"

    # Config 3: exercises an explicit multi-group grid with Bg > 1 (block-diag W path).
    A2, X2, W2 = _make_inputs(k_b, batch=4, d=64, n=16, out_features=32)
    ref2 = reference(A2, X2, W2)
    run_grp = jax.jit(functools.partial(diffusion_graph_convolution,
                                        compute_dtype=jnp.bfloat16, batch_block=2))
    out2 = jax.block_until_ready(run_grp(A2, X2, W2))
    assert out2.shape == ref2.shape
    assert _rel_err(out2, ref2) < 5e-2, "grouped bf16 kernel mismatch vs reference"

    print("KERNEL_OK")
</pallas_src>

<mosaic_0001>
module attributes {stable_mosaic.version = 11 : i64} {
  func.func @dgc_kernel(%arg0: i32, %arg1: memref<1x16x4xf32, #tpu.memory_space<vmem>>, %arg2: memref<2x16x16xf32, #tpu.memory_space<vmem>>, %arg3: memref<5x4x32xf32, #tpu.memory_space<vmem>>, %arg4: memref<1x16x32xf32, #tpu.memory_space<vmem>>) attributes {dimension_semantics = [#tpu.dimension_semantics<parallel>], iteration_bounds = array<i64: 2>, scalar_prefetch = 0 : i64, scratch_operands = 0 : i64, tpu.core_type = #tpu.core_type<tc>, window_params = [{transform_indices = @transform_0, window_bounds = array<i64: 1, 16, 4>}, {pipeline_mode = #tpu.pipeline_mode<synchronous>, transform_indices = @transform_1, window_bounds = array<i64: 2, 16, 16>}, {pipeline_mode = #tpu.pipeline_mode<synchronous>, transform_indices = @transform_2, window_bounds = array<i64: 5, 4, 32>}, {transform_indices = @transform_3, window_bounds = array<i64: 1, 16, 32>}]} {
    %c0 = arith.constant 0 : index
    %c0_0 = arith.constant 0 : index
    %c0_1 = arith.constant 0 : index
    %0 = vector.load %arg1[%c0, %c0_0, %c0_1] : memref<1x16x4xf32, #tpu.memory_space<vmem>>, vector<1x16x4xf32>
    %1 = vector.shape_cast %0 : vector<1x16x4xf32> to vector<16x4xf32>
    %c0_2 = arith.constant 0 : index
    %c0_3 = arith.constant 0 : index
    %c0_4 = arith.constant 0 : index
    %2 = vector.load %arg3[%c0_2, %c0_3, %c0_4] : memref<5x4x32xf32, #tpu.memory_space<vmem>>, vector<1x4x32xf32>
    %3 = vector.shape_cast %2 : vector<1x4x32xf32> to vector<4x32xf32>
    %cst = arith.constant dense<0.000000e+00> : vector<16x32xf32>
    %4 = tpu.matmul %1, %3, %cst {dimension_numbers = #tpu.dot_dimension_numbers<[1], [0], [0], [1], [0, 0, 1, 1], [], []>} : vector<16x4xf32>, vector<4x32xf32>, vector<16x32xf32> -> vector<16x32xf32>
    %c0_5 = arith.constant 0 : index
    %c0_6 = arith.constant 0 : index
    %c0_7 = arith.constant 0 : index
    %5 = vector.load %arg2[%c0_5, %c0_6, %c0_7] : memref<2x16x16xf32, #tpu.memory_space<vmem>>, vector<1x16x16xf32>
    %6 = vector.shape_cast %5 : vector<1x16x16xf32> to vector<16x16xf32>
    %cst_8 = arith.constant dense<0.000000e+00> : vector<16x4xf32>
    %7 = tpu.matmul %6, %1, %cst_8 {dimension_numbers = #tpu.dot_dimension_numbers<[1], [0], [0], [1], [0, 0, 1, 1], [], []>} : vector<16x16xf32>, vector<16x4xf32>, vector<16x4xf32> -> vector<16x4xf32>
    %c1 = arith.constant 1 : index
    %c0_9 = arith.constant 0 : index
    %c0_10 = arith.constant 0 : index
    %8 = vector.load %arg3[%c1, %c0_9, %c0_10] : memref<5x4x32xf32, #tpu.memory_space<vmem>>, vector<1x4x32xf32>
    %9 = vector.shape_cast %8 : vector<1x4x32xf32> to vector<4x32xf32>
    %cst_11 = arith.constant dense<0.000000e+00> : vector<16x32xf32>
    %10 = tpu.matmul %7, %9, %cst_11 {dimension_numbers = #tpu.dot_dimension_numbers<[1], [0], [0], [1], [0, 0, 1, 1], [], []>} : vector<16x4xf32>, vector<4x32xf32>, vector<16x32xf32> -> vector<16x32xf32>
    %11 = arith.addf %4, %10 : vector<16x32xf32>
    %cst_12 = arith.constant dense<0.000000e+00> : vector<16x4xf32>
    %12 = tpu.matmul %6, %7, %cst_12 {dimension_numbers = #tpu.dot_dimension_numbers<[1], [0], [0], [1], [0, 0, 1, 1], [], []>} : vector<16x16xf32>, vector<16x4xf32>, vector<16x4xf32> -> vector<16x4xf32>
    %cst_13 = arith.constant 2.000000e+00 : f32
    %13 = vector.broadcast %cst_13 : f32 to vector<16x4xf32>
    %14 = arith.mulf %13, %12 : vector<16x4xf32>
    %15 = arith.subf %14, %1 : vector<16x4xf32>
    %c2 = arith.constant 2 : index
    %c0_14 = arith.constant 0 : index
    %c0_15 = arith.constant 0 : index
    %16 = vector.load %arg3[%c2, %c0_14, %c0_15] : memref<5x4x32xf32, #tpu.memory_space<vmem>>, vector<1x4x32xf32>
    %17 = vector.shape_cast %16 : vector<1x4x32xf32> to vector<4x32xf32>
    %cst_16 = arith.constant dense<0.000000e+00> : vector<16x32xf32>
    %18 = tpu.matmul %15, %17, %cst_16 {dimension_numbers = #tpu.dot_dimension_numbers<[1], [0], [0], [1], [0, 0, 1, 1], [], []>} : vector<16x4xf32>, vector<4x32xf32>, vector<16x32xf32> -> vector<16x32xf32>
    %19 = arith.addf %11, %18 : vector<16x32xf32>
    %c1_17 = arith.constant 1 : index
    %c0_18 = arith.constant 0 : index
    %c0_19 = arith.constant 0 : index
    %20 = vector.load %arg2[%c1_17, %c0_18, %c0_19] : memref<2x16x16xf32, #tpu.memory_space<vmem>>, vector<1x16x16xf32>
    %21 = vector.shape_cast %20 : vector<1x16x16xf32> to vector<16x16xf32>
    %cst_20 = arith.constant dense<0.000000e+00> : vector<16x4xf32>
    %22 = tpu.matmul %21, %1, %cst_20 {dimension_numbers = #tpu.dot_dimension_numbers<[1], [0], [0], [1], [0, 0, 1, 1], [], []>} : vector<16x16xf32>, vector<16x4xf32>, vector<16x4xf32> -> vector<16x4xf32>
    %c3 = arith.constant 3 : index
    %c0_21 = arith.constant 0 : index
    %c0_22 = arith.constant 0 : index
    %23 = vector.load %arg3[%c3, %c0_21, %c0_22] : memref<5x4x32xf32, #tpu.memory_space<vmem>>, vector<1x4x32xf32>
    %24 = vector.shape_cast %23 : vector<1x4x32xf32> to vector<4x32xf32>
    %cst_23 = arith.constant dense<0.000000e+00> : vector<16x32xf32>
    %25 = tpu.matmul %22, %24, %cst_23 {dimension_numbers = #tpu.dot_dimension_numbers<[1], [0], [0], [1], [0, 0, 1, 1], [], []>} : vector<16x4xf32>, vector<4x32xf32>, vector<16x32xf32> -> vector<16x32xf32>
    %26 = arith.addf %19, %25 : vector<16x32xf32>
    %cst_24 = arith.constant dense<0.000000e+00> : vector<16x4xf32>
    %27 = tpu.matmul %21, %22, %cst_24 {dimension_numbers = #tpu.dot_dimension_numbers<[1], [0], [0], [1], [0, 0, 1, 1], [], []>} : vector<16x16xf32>, vector<16x4xf32>, vector<16x4xf32> -> vector<16x4xf32>
    %cst_25 = arith.constant 2.000000e+00 : f32
    %28 = vector.broadcast %cst_25 : f32 to vector<16x4xf32>
    %29 = arith.mulf %28, %27 : vector<16x4xf32>
    %30 = arith.subf %29, %1 : vector<16x4xf32>
    %c4 = arith.constant 4 : index
    %c0_26 = arith.constant 0 : index
    %c0_27 = arith.constant 0 : index
    %31 = vector.load %arg3[%c4, %c0_26, %c0_27] : memref<5x4x32xf32, #tpu.memory_space<vmem>>, vector<1x4x32xf32>
    %32 = vector.shape_cast %31 : vector<1x4x32xf32> to vector<4x32xf32>
    %cst_28 = arith.constant dense<0.000000e+00> : vector<16x32xf32>
    %33 = tpu.matmul %30, %32, %cst_28 {dimension_numbers = #tpu.dot_dimension_numbers<[1], [0], [0], [1], [0, 0, 1, 1], [], []>} : vector<16x4xf32>, vector<4x32xf32>, vector<16x32xf32> -> vector<16x32xf32>
    %34 = arith.addf %26, %33 : vector<16x32xf32>
    %c0_29 = arith.constant 0 : index
    %c0_30 = arith.constant 0 : index
    %c0_31 = arith.constant 0 : index
    %35 = vector.load %arg4[%c0_29, %c0_30, %c0_31] : memref<1x16x32xf32, #tpu.memory_space<vmem>>, vector<1x16x32xf32>
    %36 = vector.shape_cast %35 : vector<1x16x32xf32> to vector<16x32xf32>
    %37 = vector.shape_cast %34 : vector<16x32xf32> to vector<1x16x32xf32>
    tpu.vector_store %arg4[%c0_29, %c0_30, %c0_31], %37 {strides = array<i32>} : memref<1x16x32xf32, #tpu.memory_space<vmem>>, vector<1x16x32xf32>,
    return
  }
  func.func @transform_0(%arg0: i32) -> (i32, i32, i32) {
    %c0_i32 = arith.constant 0 : i32
    %c0_i32_0 = arith.constant 0 : i32
    %c0_i32_1 = arith.constant 0 : i32
    return %arg0, %c0_i32, %c0_i32_0 : i32, i32, i32
  }
  func.func @transform_1(%arg0: i32) -> (i32, i32, i32) {
    %c0_i32 = arith.constant 0 : i32
    %c0_i32_0 = arith.constant 0 : i32
    %c0_i32_1 = arith.constant 0 : i32
    %c0_i32_2 = arith.constant 0 : i32
    return %c0_i32, %c0_i32_0, %c0_i32_1 : i32, i32, i32
  }
  func.func @transform_2(%arg0: i32) -> (i32, i32, i32) {
    %c0_i32 = arith.constant 0 : i32
    %c0_i32_0 = arith.constant 0 : i32
    %c0_i32_1 = arith.constant 0 : i32
    %c0_i32_2 = arith.constant 0 : i32
    return %c0_i32, %c0_i32_0, %c0_i32_1 : i32, i32, i32
  }
  func.func @transform_3(%arg0: i32) -> (i32, i32, i32) {
    %c0_i32 = arith.constant 0 : i32
    %c0_i32_0 = arith.constant 0 : i32
    %c0_i32_1 = arith.constant 0 : i32
    return %arg0, %c0_i32, %c0_i32_0 : i32, i32, i32
  }
}

</mosaic_0001>

<llo_original>
// kernel: diffusion_graph_convolution.1
$region0: #{diffusion_graph_convolution.1}
  #allocation0 [shape = 'u32[]', space=smem, size = 0x4, offset = 0x4, fixed_abs, tag = 'smem constant byte address 0x4 - core index']
  #allocation1 [shape = 'u32[144,128]{1,0:T(1,128)}', space=vmem, size = 0x12000, scoped, tag = 'internal scratch']
  %s0 = inlined_call_operand.vmem [shape: f32[2,16,4], index: 0, kind: input, shape index: {}]
  %s1 = inlined_call_operand.vmem [shape: f32[2,16,16], index: 1, kind: input, shape index: {}]
  %s2 = inlined_call_operand.vmem [shape: f32[5,4,32], index: 2, kind: input, shape index: {}]
  %s3 = inlined_call_operand.hbm [shape: f32[2,16,32], index: 3, kind: output, shape index: {}]
  %s4 = sld [smem:[#allocation0]]
  $region45: #{diffusion_graph_convolution.1} parent=0
    _
  %s6 = ssub.s32 1, %s4
  %s7 = scalar_select 0, %s6, %s4
  $region1: #{diffusion_graph_convolution.1} parent=0
    #allocation2 [shape = 'u8[16384]{0}', space=vmem, size = 0x4000, scoped, tag = 'output window, operand 0']
    #allocation3 [shape = 's32[2]{0}', space=sflag, size = 0x8, scoped, tag = 'scoped memory for diffusion_graph_convolution.1']
    %8 = vsyncpa [#allocation3], 0
    %s9 = scalar_lea.sflag [#allocation3], 1
    %10 = vsyncpa %s9, 0
    loop: start=0, step=1, limit=4
    $region2: #{diffusion_graph_convolution.1} parent=1 // loop_pre_header
      _
    $region3: #{diffusion_graph_convolution.1} parent=1 // loop_header
      %s12 = sphi 0, %s16
      %p13 = scmp.ge.s32.totalorder %s12, 4
      %s22 = sphi 0, %s24
      %s25 = sphi 0, %s22
      %s26 = sphi 0, %s25
      %s42 = sphi 0, %s26
      %s46 = sphi 0, %s46
      %s48 = sphi 0, %s46
      %s49 = sphi 0, %s48
      %s63 = sphi 0, %s49
      %s67 = sphi 0, %s67
      %s69 = sphi 0, %s67
      %s70 = sphi 0, %s69
      %s84 = sphi 0, %s70
      %s90 = sphi 0, %s92
      %s93 = sphi 0, %s90
      %s94 = sphi 0, %s93
      %s110 = sphi 0, %s94
    $region4: #{diffusion_graph_convolution.1} parent=1 // loop_header_branch
      %15 = sbr.rel (%p13) target = $region8
    $region5: #{diffusion_graph_convolution.1} parent=1 // loop_body
      %s17 = ssub.s32 %s12, 1
      %s18 = ssub.s32 %s12, 2
      %s19 = sadd.s32 %s12, 1
      %s20 = ssub.s32 %s12, %s19
      %p21 = scmp.eq.s32.totalorder %s20, 0
      %s23 = sadd.s32 %s22, 1
      %s24 = scalar_select %p21, %s22, %s23
      %p27 = pneg %p21
      %p28 = scmp.eq.s32.totalorder %s12, 1
      %p29 = por %p27, %p28
      %p30 = scmp.ne.s32.totalorder %s22, %s25
      %p31 = scmp.eq.s32.totalorder %s12, 0
      %p32 = por %p30, %p31
      %p33 = scmp.ne.s32.totalorder %s22, %s25
      %p34 = scmp.eq.s32.totalorder %s17, 1
      %p35 = por %p33, %p34
      %p36 = scmp.ne.s32.totalorder %s25, %s26
      %p37 = scmp.eq.s32.totalorder %s17, 0
      %p38 = por %p36, %p37
      %p39 = scmp.ne.s32.totalorder %s25, %s26
      %p40 = scmp.eq.s32.totalorder %s18, 1
      %p41 = por %p39, %p40
      %p43 = scmp.ne.s32.totalorder %s26, %s42
      %p44 = scmp.eq.s32.totalorder %s18, 0
      %p45 = por %p43, %p44
      %s47 = sadd.s32 %s46, 1
      %p50 = scmp.eq.s32.totalorder %s12, 1
      %p51 = scmp.ne.s32.totalorder %s46, %s48
      %p52 = scmp.eq.s32.totalorder %s12, 0
      %p53 = por %p51, %p52
      %p54 = scmp.ne.s32.totalorder %s46, %s48
      %p55 = scmp.eq.s32.totalorder %s17, 1
      %p56 = por %p54, %p55
      %p57 = scmp.ne.s32.totalorder %s48, %s49
      %p58 = scmp.eq.s32.totalorder %s17, 0
      %p59 = por %p57, %p58
      %p60 = scmp.ne.s32.totalorder %s48, %s49
      %p61 = scmp.eq.s32.totalorder %s18, 1
      %p62 = por %p60, %p61
      %p64 = scmp.ne.s32.totalorder %s49, %s63
      %p65 = scmp.eq.s32.totalorder %s18, 0
      %p66 = por %p64, %p65
      %s68 = sadd.s32 %s67, 1
      %p71 = scmp.eq.s32.totalorder %s12, 1
      %p72 = scmp.ne.s32.totalorder %s67, %s69
      %p73 = scmp.eq.s32.totalorder %s12, 0
      %p74 = por %p72, %p73
      %p75 = scmp.ne.s32.totalorder %s67, %s69
      %p76 = scmp.eq.s32.totalorder %s17, 1
      %p77 = por %p75, %p76
      %p78 = scmp.ne.s32.totalorder %s69, %s70
      %p79 = scmp.eq.s32.totalorder %s17, 0
      %p80 = por %p78, %p79
      %p81 = scmp.ne.s32.totalorder %s69, %s70
      %p82 = scmp.eq.s32.totalorder %s18, 1
      %p83 = por %p81, %p82
      %p85 = scmp.ne.s32.totalorder %s70, %s84
      %p86 = scmp.eq.s32.totalorder %s18, 0
      %p87 = por %p85, %p86
      %s88 = ssub.s32 %s12, %s19
      %p89 = scmp.eq.s32.totalorder %s88, 0
      %s91 = sadd.s32 %s90, 1
      %s92 = scalar_select %p89, %s90, %s91
      %p95 = pneg %p89
      %p96 = scmp.eq.s32.totalorder %s12, 1
      %p97 = por %p95, %p96
      %p98 = scmp.ne.s32.totalorder %s90, %s93
      %p99 = scmp.eq.s32.totalorder %s12, 0
      %p100 = por %p98, %p99
      %p101 = scmp.ne.s32.totalorder %s90, %s93
      %p102 = scmp.eq.s32.totalorder %s17, 1
      %p103 = por %p101, %p102
      %p104 = scmp.ne.s32.totalorder %s93, %s94
      %p105 = scmp.eq.s32.totalorder %s17, 0
      %p106 = por %p104, %p105
      %p107 = scmp.ne.s32.totalorder %s93, %s94
      %p108 = scmp.eq.s32.totalorder %s18, 1
      %p109 = por %p107, %p108
      %p111 = scmp.ne.s32.totalorder %s94, %s110
      %p112 = scmp.eq.s32.totalorder %s18, 0
      %p113 = por %p111, %p112
      %p114 = scmp.le.s32.totalorder 1, %s12
      %p115 = scmp.lt.s32.totalorder %s12, 3
      %p116 = pnand %p114, %p115
      %p117 = pneg %p116
      // Predicated region
      $region9: #{diffusion_graph_convolution.1} parent=5 // pred_check
        _
      $region10: #{diffusion_graph_convolution.1} parent=5 // pred_check_branch
        %119 = sbr.rel (%p116) target = $region12
      $region11: #{diffusion_graph_convolution.1} parent=5 // pred_region
        %s120 = ssub.s32 %s12, 1
        // Predicated region
        $region13: #{diffusion_graph_convolution.1} parent=11 // pred_check
          %p121 = pneg %p59
        $region14: #{diffusion_graph_convolution.1} parent=11 // pred_check_branch
          %123 = sbr.rel (%p121) target = $region16
        $region15: #{diffusion_graph_convolution.1} parent=11 // pred_region
          _
        $region16: #{diffusion_graph_convolution.1} parent=11 // pred_fallthru
          _
        // Predicated region
        $region17: #{diffusion_graph_convolution.1} parent=11 // pred_check
          %p124 = pneg %p80
        $region18: #{diffusion_graph_convolution.1} parent=11 // pred_check_branch
          %126 = sbr.rel (%p124) target = $region20
        $region19: #{diffusion_graph_convolution.1} parent=11 // pred_region
          _
        $region20: #{diffusion_graph_convolution.1} parent=11 // pred_fallthru
          _
      $region12: #{diffusion_graph_convolution.1} parent=5 // pred_fallthru
        _
      %p127 = scmp.lt.s32.totalorder %s12, 2
      // Predicated region
      $region21: #{diffusion_graph_convolution.1} parent=5 // pred_check
        %p128 = pneg %p127
      $region22: #{diffusion_graph_convolution.1} parent=5 // pred_check_branch
        %130 = sbr.rel (%p128) target = $region24
      $region23: #{diffusion_graph_convolution.1} parent=5 // pred_region
        // Predicated region
        $region25: #{diffusion_graph_convolution.1} parent=23 // pred_check
          %p131 = pneg %p32
        $region26: #{diffusion_graph_convolution.1} parent=23 // pred_check_branch
          %133 = sbr.rel (%p131) target = $region28
        $region27: #{diffusion_graph_convolution.1} parent=23 // pred_region
          %p134 = scmp.lt.s32.totalorder %s12, 1
          %s135 = scalar_select %p134, %s12, 1
          %s136 = smul.addr %s135, 2
          %s137 = smul.addr %s136, 8
          %s138 = scalar_lea.vmem %s0, %s137
        $region28: #{diffusion_graph_convolution.1} parent=23 // pred_fallthru
          _
      $region24: #{diffusion_graph_convolution.1} parent=5 // pred_fallthru
        _
      %p139 = scmp.le.s32.totalorder 1, %s12
      %p140 = scmp.lt.s32.totalorder %s12, 3
      %p141 = pnand %p139, %p140
      %p142 = pneg %p141
      // Predicated region
      $region29: #{diffusion_graph_convolution.1} parent=5 // pred_check
        _
      $region30: #{diffusion_graph_convolution.1} parent=5 // pred_check_branch
        %144 = sbr.rel (%p141) target = $region32
      $region31: #{diffusion_graph_convolution.1} parent=5 // pred_region
        %s145 = ssub.s32 %s12, 1
        %p146 = scmp.lt.s32.totalorder %s17, 1
        %s147 = scalar_select %p146, %s17, 1
        %s148 = smul.addr %s147, 2
        %s149 = smul.addr %s148, 8
        %s150 = scalar_lea.vmem %s0, %s149
        %p151 = pneg %p38
        %p152 = pneg %p35
        %p153 = pneg %p59
        %p154 = pneg %p56
        %p155 = pneg %p80
        %p156 = pneg %p77
        %p157 = pneg %p106
        %p158 = pneg %p103
        %s159 = sand.u32 %s93, 1
        %s160 = scalar_lea.sflag [#allocation3], %s159
        %s161 = sand.u32 %s93, 1
        %s162 = smul.addr %s161, 16
        %s163 = scalar_lea.vmem [#allocation2], %s162
        %p164 = scmp.lt.s32.totalorder %s17, 1
        %s165 = scalar_select %p164, %s17, 1
        %s166 = smul.addr %s165, 2
        %s167 = smul.addr %s166, 8
        %s168 = scalar_lea.vmem %s0, %s167
        %v169 = vld [vmem:[%s168] sm:$0xff]
        %v170 = vld [vmem:[%s168 + $0x8] sm:$0xff]
        %v171 = vld [vmem:[%s2] sm:$0xf]
        %v172 = vld [vmem:[%s1] sm:$0xff]
        %v173 = vld [vmem:[%s1 + $0x8] sm:$0xff]
        %vm174 = vcmask 130048
        %v176 = vsel %vm174, %v172, 0
        %v179 = vsel %vm174, %v173, 0
        %181 = vmatprep.subr.mxu0 0.0
        %182 = vmatpush1.msra.mxu0 0.0
        %183 = vmatprep.subr.mxu0 0.0
        %184 = vmatpush1.msra.mxu0 0.0
        %185 = vmatprep.subr.mxu0 0.0
        %186 = vmatpush1.msra.mxu0 0.0
        %187 = vmatprep.subr.mxu0 0.0
        %188 = vmatpush1.msra.mxu0 0.0
        %189 = vmatprep.subr.mxu0 0.0
        %190 = vmatpush1.msra.mxu0 0.0
        %191 = vmatprep.subr.mxu0 0.0
        %192 = vmatpush1.msra.mxu0 0.0
        %193 = vmatprep.subr.mxu0 0.0
        %194 = vmatpush1.msra.mxu0 0.0
        %195 = vmatprep.subr.mxu0 0.0
        %196 = vmatpush1.msra.mxu0 0.0
        %197 = vmatprep.subr.mxu0 0.0
        %198 = vmatpush1.msra.mxu0 0.0
        %199 = vmatprep.subr.mxu0 0.0
        %200 = vmatpush1.msra.mxu0 0.0
        %201 = vmatprep.subr.mxu0 0.0
        %202 = vmatpush1.msra.mxu0 0.0
        %203 = vmatprep.subr.mxu0 0.0
        %204 = vmatpush1.msra.mxu0 0.0
        %205 = vmatprep.subr.mxu0 0.0
        %206 = vmatpush1.msra.mxu0 0.0
        %207 = vmatprep.subr.mxu0 0.0
        %208 = vmatpush1.msra.mxu0 0.0
        %209 = vmatprep.subr.mxu0 0.0
        %210 = vmatpush1.msra.mxu0 %v170
        %211 = vmatprep.subr.mxu0 0.0
        %212 = vmatpush1.msra.mxu0 %v169
        %213 = vmatprep.subr.mxu0 0.0
        %214 = vmatpush2.msra.mxu0 0.0
        %215 = vmatprep.subr.mxu0 0.0
        %216 = vmatpush2.msra.mxu0 0.0
        %217 = vmatprep.subr.mxu0 0.0
        %218 = vmatpush2.msra.mxu0 0.0
        %219 = vmatprep.subr.mxu0 0.0
        %220 = vmatpush2.msra.mxu0 0.0
        %221 = vmatprep.subr.mxu0 0.0
        %222 = vmatpush2.msra.mxu0 0.0
        %223 = vmatprep.subr.mxu0 0.0
        %224 = vmatpush2.msra.mxu0 0.0
        %225 = vmatprep.subr.mxu0 0.0
        %226 = vmatpush2.msra.mxu0 0.0
        %227 = vmatprep.subr.mxu0 0.0
        %228 = vmatpush2.msra.mxu0 0.0
        %229 = vmatprep.subr.mxu0 0.0
        %230 = vmatpush2.msra.mxu0 0.0
        %231 = vmatprep.subr.mxu0 0.0
        %232 = vmatpush2.msra.mxu0 0.0
        %233 = vmatprep.subr.mxu0 0.0
        %234 = vmatpush2.msra.mxu0 0.0
        %235 = vmatprep.subr.mxu0 0.0
        %236 = vmatpush2.msra.mxu0 0.0
        %237 = vmatprep.subr.mxu0 0.0
        %238 = vmatpush2.msra.mxu0 0.0
        %239 = vmatprep.subr.mxu0 0.0
        %240 = vmatpush2.msra.mxu0 0.0
        %241 = vmatprep.subr.mxu0 0.0
        %242 = vmatpush2.msra.mxu0 0.0
        %243 = vmatprep.subr.mxu0 0.0
        %244 = vmatpush2.msra.mxu0 0.0
        %245 = vmatprep.mubr.f32.mxu0 0.0
        %246 = vmatmul.mubr.f32.gmra.mxu0 %v176
        %v247 = vpop.f32.mrf.mxu0
        %v248 = vadd.f32 0.0, %v247
        %v249 = vpop.f32.mrf.mxu0
        %250 = vmatprep.mubr.f32.mxu0 0.0
        %251 = vmatmul.mubr.f32.gmra.mxu0 %v179
        %v252 = vpop.f32.mrf.mxu0
        %v253 = vadd.f32 0.0, %v252
        %v254 = vpop.f32.mrf.mxu0
        %255 = vdwg.mxu0
        %s256 = scalar_lea.vmem %s2, 4
        %v257 = vld [vmem:[%s256] sm:$0xf]
        %vm258 = vcmask 31744
        %v260 = vsel %vm258, %v248, 0
        %v263 = vsel %vm258, %v253, 0
        %vm265 = vcmask 1043456
        %v267 = vsel %vm265, %v257, 0
        %269 = vmatprep.subr.mxu0 0.0
        %270 = vmatpush1.msra.mxu0 0.0
        %271 = vmatprep.subr.mxu0 0.0
        %272 = vmatpush1.msra.mxu0 0.0
        %273 = vmatprep.subr.mxu0 0.0
        %274 = vmatpush1.msra.mxu0 0.0
        %275 = vmatprep.subr.mxu0 0.0
        %276 = vmatpush1.msra.mxu0 0.0
        %277 = vmatprep.subr.mxu0 0.0
        %278 = vmatpush1.msra.mxu0 0.0
        %279 = vmatprep.subr.mxu0 0.0
        %280 = vmatpush1.msra.mxu0 0.0
        %281 = vmatprep.subr.mxu0 0.0
        %282 = vmatpush1.msra.mxu0 0.0
        %283 = vmatprep.subr.mxu0 0.0
        %284 = vmatpush1.msra.mxu0 0.0
        %285 = vmatprep.subr.mxu0 0.0
        %286 = vmatpush1.msra.mxu0 0.0
        %287 = vmatprep.subr.mxu0 0.0
        %288 = vmatpush1.msra.mxu0 0.0
        %289 = vmatprep.subr.mxu0 0.0
        %290 = vmatpush1.msra.mxu0 0.0
        %291 = vmatprep.subr.mxu0 0.0
        %292 = vmatpush1.msra.mxu0 0.0
        %293 = vmatprep.subr.mxu0 0.0
        %294 = vmatpush1.msra.mxu0 0.0
        %295 = vmatprep.subr.mxu0 0.0
        %296 = vmatpush1.msra.mxu0 0.0
        %297 = vmatprep.subr.mxu0 0.0
        %298 = vmatpush1.msra.mxu0 0.0
        %299 = vmatprep.subr.mxu0 0.0
        %300 = vmatpush1.msra.mxu0 %v267
        %301 = vmatprep.subr.mxu0 0.0
        %302 = vmatpush2.msra.mxu0 0.0
        %303 = vmatprep.subr.mxu0 0.0
        %304 = vmatpush2.msra.mxu0 0.0
        %305 = vmatprep.subr.mxu0 0.0
        %306 = vmatpush2.msra.mxu0 0.0
        %307 = vmatprep.subr.mxu0 0.0
        %308 = vmatpush2.msra.mxu0 0.0
        %309 = vmatprep.subr.mxu0 0.0
        %310 = vmatpush2.msra.mxu0 0.0
        %311 = vmatprep.subr.mxu0 0.0
        %312 = vmatpush2.msra.mxu0 0.0
        %313 = vmatprep.subr.mxu0 0.0
        %314 = vmatpush2.msra.mxu0 0.0
        %315 = vmatprep.subr.mxu0 0.0
        %316 = vmatpush2.msra.mxu0 0.0
        %317 = vmatprep.subr.mxu0 0.0
        %318 = vmatpush2.msra.mxu0 0.0
        %319 = vmatprep.subr.mxu0 0.0
        %320 = vmatpush2.msra.mxu0 0.0
        %321 = vmatprep.subr.mxu0 0.0
        %322 = vmatpush2.msra.mxu0 0.0
        %323 = vmatprep.subr.mxu0 0.0
        %324 = vmatpush2.msra.mxu0 0.0
        %325 = vmatprep.subr.mxu0 0.0
        %326 = vmatpush2.msra.mxu0 0.0
        %327 = vmatprep.subr.mxu0 0.0
        %328 = vmatpush2.msra.mxu0 0.0
        %329 = vmatprep.subr.mxu0 0.0
        %330 = vmatpush2.msra.mxu0 0.0
        %331 = vmatprep.subr.mxu0 0.0
        %332 = vmatpush2.msra.mxu0 0.0
        %333 = vmatprep.mubr.f32.mxu0 0.0
        %334 = vmatmul.mubr.f32.gmra.mxu0 %v260
        %v335 = vpop.f32.mrf.mxu0
        %v336 = vadd.f32 0.0, %v335
        %v337 = vpop.f32.mrf.mxu0
        %338 = vmatprep.mubr.f32.mxu0 0.0
        %339 = vmatmul.mubr.f32.gmra.mxu0 %v263
        %v340 = vpop.f32.mrf.mxu0
        %v341 = vadd.f32 0.0, %v340
        %v342 = vpop.f32.mrf.mxu0
        %343 = vdwg.mxu0
        %v345 = vsel %vm258, %v169, 0
        %v348 = vsel %vm258, %v170, 0
        %v351 = vsel %vm265, %v171, 0
        %353 = vmatprep.subr.mxu0 0.0
        %354 = vmatpush1.msra.mxu0 0.0
        %355 = vmatprep.subr.mxu0 0.0
        %356 = vmatpush1.msra.mxu0 0.0
        %357 = vmatprep.subr.mxu0 0.0
        %358 = vmatpush1.msra.mxu0 0.0
        %359 = vmatprep.subr.mxu0 0.0
        %360 = vmatpush1.msra.mxu0 0.0
        %361 = vmatprep.subr.mxu0 0.0
        %362 = vmatpush1.msra.mxu0 0.0
        %363 = vmatprep.subr.mxu0 0.0
        %364 = vmatpush1.msra.mxu0 0.0
        %365 = vmatprep.subr.mxu0 0.0
        %366 = vmatpush1.msra.mxu0 0.0
        %367 = vmatprep.subr.mxu0 0.0
        %368 = vmatpush1.msra.mxu0 0.0
        %369 = vmatprep.subr.mxu0 0.0
        %370 = vmatpush1.msra.mxu0 0.0
        %371 = vmatprep.subr.mxu0 0.0
        %372 = vmatpush1.msra.mxu0 0.0
        %373 = vmatprep.subr.mxu0 0.0
        %374 = vmatpush1.msra.mxu0 0.0
        %375 = vmatprep.subr.mxu0 0.0
        %376 = vmatpush1.msra.mxu0 0.0
        %377 = vmatprep.subr.mxu0 0.0
        %378 = vmatpush1.msra.mxu0 0.0
        %379 = vmatprep.subr.mxu0 0.0
        %380 = vmatpush1.msra.mxu0 0.0
        %381 = vmatprep.subr.mxu0 0.0
        %382 = vmatpush1.msra.mxu0 0.0
        %383 = vmatprep.subr.mxu0 0.0
        %384 = vmatpush1.msra.mxu0 %v351
        %385 = vmatprep.subr.mxu0 0.0
        %386 = vmatpush2.msra.mxu0 0.0
        %387 = vmatprep.subr.mxu0 0.0
        %388 = vmatpush2.msra.mxu0 0.0
        %389 = vmatprep.subr.mxu0 0.0
        %390 = vmatpush2.msra.mxu0 0.0
        %391 = vmatprep.subr.mxu0 0.0
        %392 = vmatpush2.msra.mxu0 0.0
        %393 = vmatprep.subr.mxu0 0.0
        %394 = vmatpush2.msra.mxu0 0.0
        %395 = vmatprep.subr.mxu0 0.0
        %396 = vmatpush2.msra.mxu0 0.0
        %397 = vmatprep.subr.mxu0 0.0
        %398 = vmatpush2.msra.mxu0 0.0
        %399 = vmatprep.subr.mxu0 0.0
        %400 = vmatpush2.msra.mxu0 0.0
        %401 = vmatprep.subr.mxu0 0.0
        %402 = vmatpush2.msra.mxu0 0.0
        %403 = vmatprep.subr.mxu0 0.0
        %404 = vmatpush2.msra.mxu0 0.0
        %405 = vmatprep.subr.mxu0 0.0
        %406 = vmatpush2.msra.mxu0 0.0
        %407 = vmatprep.subr.mxu0 0.0
        %408 = vmatpush2.msra.mxu0 0.0
        %409 = vmatprep.subr.mxu0 0.0
        %410 = vmatpush2.msra.mxu0 0.0
        %411 = vmatprep.subr.mxu0 0.0
        %412 = vmatpush2.msra.mxu0 0.0
        %413 = vmatprep.subr.mxu0 0.0
        %414 = vmatpush2.msra.mxu0 0.0
        %415 = vmatprep.subr.mxu0 0.0
        %416 = vmatpush2.msra.mxu0 0.0
        %417 = vmatprep.mubr.f32.mxu0 0.0
        %418 = vmatmul.mubr.f32.gmra.mxu0 %v345
        %v419 = vpop.f32.mrf.mxu0
        %v420 = vadd.f32 %v336, %v419
        %v421 = vpop.f32.mrf.mxu0
        %422 = vmatprep.mubr.f32.mxu0 0.0
        %423 = vmatmul.mubr.f32.gmra.mxu0 %v348
        %v424 = vpop.f32.mrf.mxu0
        %v425 = vadd.f32 %v341, %v424
        %v426 = vpop.f32.mrf.mxu0
        %427 = vdwg.mxu0
        %428 = vmatprep.subr.mxu0 0.0
        %429 = vmatpush1.msra.mxu0 0.0
        %430 = vmatprep.subr.mxu0 0.0
        %431 = vmatpush1.msra.mxu0 0.0
        %432 = vmatprep.subr.mxu0 0.0
        %433 = vmatpush1.msra.mxu0 0.0
        %434 = vmatprep.subr.mxu0 0.0
        %435 = vmatpush1.msra.mxu0 0.0
        %436 = vmatprep.subr.mxu0 0.0
        %437 = vmatpush1.msra.mxu0 0.0
        %438 = vmatprep.subr.mxu0 0.0
        %439 = vmatpush1.msra.mxu0 0.0
        %440 = vmatprep.subr.mxu0 0.0
        %441 = vmatpush1.msra.mxu0 0.0
        %442 = vmatprep.subr.mxu0 0.0
        %443 = vmatpush1.msra.mxu0 0.0
        %444 = vmatprep.subr.mxu0 0.0
        %445 = vmatpush1.msra.mxu0 0.0
        %446 = vmatprep.subr.mxu0 0.0
        %447 = vmatpush1.msra.mxu0 0.0
        %448 = vmatprep.subr.mxu0 0.0
        %449 = vmatpush1.msra.mxu0 0.0
        %450 = vmatprep.subr.mxu0 0.0
        %451 = vmatpush1.msra.mxu0 0.0
        %452 = vmatprep.subr.mxu0 0.0
        %453 = vmatpush1.msra.mxu0 0.0
        %454 = vmatprep.subr.mxu0 0.0
        %455 = vmatpush1.msra.mxu0 0.0
        %456 = vmatprep.subr.mxu0 0.0
        %457 = vmatpush1.msra.mxu0 %v253
        %458 = vmatprep.subr.mxu0 0.0
        %459 = vmatpush1.msra.mxu0 %v248
        %460 = vmatprep.subr.mxu0 0.0
        %461 = vmatpush2.msra.mxu0 0.0
        %462 = vmatprep.subr.mxu0 0.0
        %463 = vmatpush2.msra.mxu0 0.0
        %464 = vmatprep.subr.mxu0 0.0
        %465 = vmatpush2.msra.mxu0 0.0
        %466 = vmatprep.subr.mxu0 0.0
        %467 = vmatpush2.msra.mxu0 0.0
        %468 = vmatprep.subr.mxu0 0.0
        %469 = vmatpush2.msra.mxu0 0.0
        %470 = vmatprep.subr.mxu0 0.0
        %471 = vmatpush2.msra.mxu0 0.0
        %472 = vmatprep.subr.mxu0 0.0
        %473 = vmatpush2.msra.mxu0 0.0
        %474 = vmatprep.subr.mxu0 0.0
        %475 = vmatpush2.msra.mxu0 0.0
        %476 = vmatprep.subr.mxu0 0.0
        %477 = vmatpush2.msra.mxu0 0.0
        %478 = vmatprep.subr.mxu0 0.0
        %479 = vmatpush2.msra.mxu0 0.0
        %480 = vmatprep.subr.mxu0 0.0
        %481 = vmatpush2.msra.mxu0 0.0
        %482 = vmatprep.subr.mxu0 0.0
        %483 = vmatpush2.msra.mxu0 0.0
        %484 = vmatprep.subr.mxu0 0.0
        %485 = vmatpush2.msra.mxu0 0.0
        %486 = vmatprep.subr.mxu0 0.0
        %487 = vmatpush2.msra.mxu0 0.0
        %488 = vmatprep.subr.mxu0 0.0
        %489 = vmatpush2.msra.mxu0 0.0
        %490 = vmatprep.subr.mxu0 0.0
        %491 = vmatpush2.msra.mxu0 0.0
        %492 = vmatprep.mubr.f32.mxu0 0.0
        %493 = vmatmul.mubr.f32.gmra.mxu0 %v176
        %v494 = vpop.f32.mrf.mxu0
        %v495 = vadd.f32 0.0, %v494
        %v496 = vpop.f32.mrf.mxu0
        %497 = vmatprep.mubr.f32.mxu0 0.0
        %498 = vmatmul.mubr.f32.gmra.mxu0 %v179
        %v499 = vpop.f32.mrf.mxu0
        %v500 = vadd.f32 0.0, %v499
        %v501 = vpop.f32.mrf.mxu0
        %502 = vdwg.mxu0
        %v503 = vmul.f32 %v495, 2.0
        %v504 = vmul.f32 %v500, 2.0
        %v505 = vsub.f32 %v503, %v169
        %v506 = vsub.f32 %v504, %v170
        %s507 = scalar_lea.vmem %s2, 8
        %v508 = vld [vmem:[%s507] sm:$0xf]
        %v510 = vsel %vm258, %v505, 0
        %v513 = vsel %vm258, %v506, 0
        %v516 = vsel %vm265, %v508, 0
        %518 = vmatprep.subr.mxu0 0.0
        %519 = vmatpush1.msra.mxu0 0.0
        %520 = vmatprep.subr.mxu0 0.0
        %521 = vmatpush1.msra.mxu0 0.0
        %522 = vmatprep.subr.mxu0 0.0
        %523 = vmatpush1.msra.mxu0 0.0
        %524 = vmatprep.subr.mxu0 0.0
        %525 = vmatpush1.msra.mxu0 0.0
        %526 = vmatprep.subr.mxu0 0.0
        %527 = vmatpush1.msra.mxu0 0.0
        %528 = vmatprep.subr.mxu0 0.0
        %529 = vmatpush1.msra.mxu0 0.0
        %530 = vmatprep.subr.mxu0 0.0
        %531 = vmatpush1.msra.mxu0 0.0
        %532 = vmatprep.subr.mxu0 0.0
        %533 = vmatpush1.msra.mxu0 0.0
        %534 = vmatprep.subr.mxu0 0.0
        %535 = vmatpush1.msra.mxu0 0.0
        %536 = vmatprep.subr.mxu0 0.0
        %537 = vmatpush1.msra.mxu0 0.0
        %538 = vmatprep.subr.mxu0 0.0
        %539 = vmatpush1.msra.mxu0 0.0
        %540 = vmatprep.subr.mxu0 0.0
        %541 = vmatpush1.msra.mxu0 0.0
        %542 = vmatprep.subr.mxu0 0.0
        %543 = vmatpush1.msra.mxu0 0.0
        %544 = vmatprep.subr.mxu0 0.0
        %545 = vmatpush1.msra.mxu0 0.0
        %546 = vmatprep.subr.mxu0 0.0
        %547 = vmatpush1.msra.mxu0 0.0
        %548 = vmatprep.subr.mxu0 0.0
        %549 = vmatpush1.msra.mxu0 %v516
        %550 = vmatprep.subr.mxu0 0.0
        %551 = vmatpush2.msra.mxu0 0.0
        %552 = vmatprep.subr.mxu0 0.0
        %553 = vmatpush2.msra.mxu0 0.0
        %554 = vmatprep.subr.mxu0 0.0
        %555 = vmatpush2.msra.mxu0 0.0
        %556 = vmatprep.subr.mxu0 0.0
        %557 = vmatpush2.msra.mxu0 0.0
        %558 = vmatprep.subr.mxu0 0.0
        %559 = vmatpush2.msra.mxu0 0.0
        %560 = vmatprep.subr.mxu0 0.0
        %561 = vmatpush2.msra.mxu0 0.0
        %562 = vmatprep.subr.mxu0 0.0
        %563 = vmatpush2.msra.mxu0 0.0
        %564 = vmatprep.subr.mxu0 0.0
        %565 = vmatpush2.msra.mxu0 0.0
        %566 = vmatprep.subr.mxu0 0.0
        %567 = vmatpush2.msra.mxu0 0.0
        %568 = vmatprep.subr.mxu0 0.0
        %569 = vmatpush2.msra.mxu0 0.0
        %570 = vmatprep.subr.mxu0 0.0
        %571 = vmatpush2.msra.mxu0 0.0
        %572 = vmatprep.subr.mxu0 0.0
        %573 = vmatpush2.msra.mxu0 0.0
        %574 = vmatprep.subr.mxu0 0.0
        %575 = vmatpush2.msra.mxu0 0.0
        %576 = vmatprep.subr.mxu0 0.0
        %577 = vmatpush2.msra.mxu0 0.0
        %578 = vmatprep.subr.mxu0 0.0
        %579 = vmatpush2.msra.mxu0 0.0
        %580 = vmatprep.subr.mxu0 0.0
        %581 = vmatpush2.msra.mxu0 0.0
        %582 = vmatprep.mubr.f32.mxu0 0.0
        %583 = vmatmul.mubr.f32.gmra.mxu0 %v510
        %v584 = vpop.f32.mrf.mxu0
        %v585 = vadd.f32 0.0, %v584
        %v586 = vpop.f32.mrf.mxu0
        %587 = vmatprep.mubr.f32.mxu0 0.0
        %588 = vmatmul.mubr.f32.gmra.mxu0 %v513
        %v589 = vpop.f32.mrf.mxu0
        %v590 = vadd.f32 0.0, %v589
        %v591 = vpop.f32.mrf.mxu0
        %592 = vdwg.mxu0
        %v593 = vadd.f32 %v420, %v585
        %v594 = vadd.f32 %v425, %v590
        %s595 = scalar_lea.vmem %s1, 16
        %v596 = vld [vmem:[%s595] sm:$0xff]
        %v597 = vld [vmem:[%s595 + $0x8] sm:$0xff]
        %v599 = vsel %vm174, %v596, 0
        %v602 = vsel %vm174, %v597, 0
        %604 = vmatprep.subr.mxu0 0.0
        %605 = vmatpush1.msra.mxu0 0.0
        %606 = vmatprep.subr.mxu0 0.0
        %607 = vmatpush1.msra.mxu0 0.0
        %608 = vmatprep.subr.mxu0 0.0
        %609 = vmatpush1.msra.mxu0 0.0
        %610 = vmatprep.subr.mxu0 0.0
        %611 = vmatpush1.msra.mxu0 0.0
        %612 = vmatprep.subr.mxu0 0.0
        %613 = vmatpush1.msra.mxu0 0.0
        %614 = vmatprep.subr.mxu0 0.0
        %615 = vmatpush1.msra.mxu0 0.0
        %616 = vmatprep.subr.mxu0 0.0
        %617 = vmatpush1.msra.mxu0 0.0
        %618 = vmatprep.subr.mxu0 0.0
        %619 = vmatpush1.msra.mxu0 0.0
        %620 = vmatprep.subr.mxu0 0.0
        %621 = vmatpush1.msra.mxu0 0.0
        %622 = vmatprep.subr.mxu0 0.0
        %623 = vmatpush1.msra.mxu0 0.0
        %624 = vmatprep.subr.mxu0 0.0
        %625 = vmatpush1.msra.mxu0 0.0
        %626 = vmatprep.subr.mxu0 0.0
        %627 = vmatpush1.msra.mxu0 0.0
        %628 = vmatprep.subr.mxu0 0.0
        %629 = vmatpush1.msra.mxu0 0.0
        %630 = vmatprep.subr.mxu0 0.0
        %631 = vmatpush1.msra.mxu0 0.0
        %632 = vmatprep.subr.mxu0 0.0
        %633 = vmatpush1.msra.mxu0 %v170
        %634 = vmatprep.subr.mxu0 0.0
        %635 = vmatpush1.msra.mxu0 %v169
        %636 = vmatprep.subr.mxu0 0.0
        %637 = vmatpush2.msra.mxu0 0.0
        %638 = vmatprep.subr.mxu0 0.0
        %639 = vmatpush2.msra.mxu0 0.0
        %640 = vmatprep.subr.mxu0 0.0
        %641 = vmatpush2.msra.mxu0 0.0
        %642 = vmatprep.subr.mxu0 0.0
        %643 = vmatpush2.msra.mxu0 0.0
        %644 = vmatprep.subr.mxu0 0.0
        %645 = vmatpush2.msra.mxu0 0.0
        %646 = vmatprep.subr.mxu0 0.0
        %647 = vmatpush2.msra.mxu0 0.0
        %648 = vmatprep.subr.mxu0 0.0
        %649 = vmatpush2.msra.mxu0 0.0
        %650 = vmatprep.subr.mxu0 0.0
        %651 = vmatpush2.msra.mxu0 0.0
        %652 = vmatprep.subr.mxu0 0.0
        %653 = vmatpush2.msra.mxu0 0.0
        %654 = vmatprep.subr.mxu0 0.0
        %655 = vmatpush2.msra.mxu0 0.0
        %656 = vmatprep.subr.mxu0 0.0
        %657 = vmatpush2.msra.mxu0 0.0
        %658 = vmatprep.subr.mxu0 0.0
        %659 = vmatpush2.msra.mxu0 0.0
        %660 = vmatprep.subr.mxu0 0.0
        %661 = vmatpush2.msra.mxu0 0.0
        %662 = vmatprep.subr.mxu0 0.0
        %663 = vmatpush2.msra.mxu0 0.0
        %664 = vmatprep.subr.mxu0 0.0
        %665 = vmatpush2.msra.mxu0 0.0
        %666 = vmatprep.subr.mxu0 0.0
        %667 = vmatpush2.msra.mxu0 0.0
        %668 = vmatprep.mubr.f32.mxu0 0.0
        %669 = vmatmul.mubr.f32.gmra.mxu0 %v599
        %v670 = vpop.f32.mrf.mxu0
        %v671 = vadd.f32 0.0, %v670
        %v672 = vpop.f32.mrf.mxu0
        %673 = vmatprep.mubr.f32.mxu0 0.0
        %674 = vmatmul.mubr.f32.gmra.mxu0 %v602
        %v675 = vpop.f32.mrf.mxu0
        %v676 = vadd.f32 0.0, %v675
        %v677 = vpop.f32.mrf.mxu0
        %678 = vdwg.mxu0
        %s679 = scalar_lea.vmem %s2, 12
        %v680 = vld [vmem:[%s679] sm:$0xf]
        %v682 = vsel %vm258, %v671, 0
        %v685 = vsel %vm258, %v676, 0
        %v688 = vsel %vm265, %v680, 0
        %690 = vmatprep.subr.mxu0 0.0
        %691 = vmatpush1.msra.mxu0 0.0
        %692 = vmatprep.subr.mxu0 0.0
        %693 = vmatpush1.msra.mxu0 0.0
        %694 = vmatprep.subr.mxu0 0.0
        %695 = vmatpush1.msra.mxu0 0.0
        %696 = vmatprep.subr.mxu0 0.0
        %697 = vmatpush1.msra.mxu0 0.0
        %698 = vmatprep.subr.mxu0 0.0
        %699 = vmatpush1.msra.mxu0 0.0
        %700 = vmatprep.subr.mxu0 0.0
        %701 = vmatpush1.msra.mxu0 0.0
        %702 = vmatprep.subr.mxu0 0.0
        %703 = vmatpush1.msra.mxu0 0.0
        %704 = vmatprep.subr.mxu0 0.0
        %705 = vmatpush1.msra.mxu0 0.0
        %706 = vmatprep.subr.mxu0 0.0
        %707 = vmatpush1.msra.mxu0 0.0
        %708 = vmatprep.subr.mxu0 0.0
        %709 = vmatpush1.msra.mxu0 0.0
        %710 = vmatprep.subr.mxu0 0.0
        %711 = vmatpush1.msra.mxu0 0.0
        %712 = vmatprep.subr.mxu0 0.0
        %713 = vmatpush1.msra.mxu0 0.0
        %714 = vmatprep.subr.mxu0 0.0
        %715 = vmatpush1.msra.mxu0 0.0
        %716 = vmatprep.subr.mxu0 0.0
        %717 = vmatpush1.msra.mxu0 0.0
        %718 = vmatprep.subr.mxu0 0.0
        %719 = vmatpush1.msra.mxu0 0.0
        %720 = vmatprep.subr.mxu0 0.0
        %721 = vmatpush1.msra.mxu0 %v688
        %722 = vmatprep.subr.mxu0 0.0
        %723 = vmatpush2.msra.mxu0 0.0
        %724 = vmatprep.subr.mxu0 0.0
        %725 = vmatpush2.msra.mxu0 0.0
        %726 = vmatprep.subr.mxu0 0.0
        %727 = vmatpush2.msra.mxu0 0.0
        %728 = vmatprep.subr.mxu0 0.0
        %729 = vmatpush2.msra.mxu0 0.0
        %730 = vmatprep.subr.mxu0 0.0
        %731 = vmatpush2.msra.mxu0 0.0
        %732 = vmatprep.subr.mxu0 0.0
        %733 = vmatpush2.msra.mxu0 0.0
        %734 = vmatprep.subr.mxu0 0.0
        %735 = vmatpush2.msra.mxu0 0.0
        %736 = vmatprep.subr.mxu0 0.0
        %737 = vmatpush2.msra.mxu0 0.0
        %738 = vmatprep.subr.mxu0 0.0
        %739 = vmatpush2.msra.mxu0 0.0
        %740 = vmatprep.subr.mxu0 0.0
        %741 = vmatpush2.msra.mxu0 0.0
        %742 = vmatprep.subr.mxu0 0.0
        %743 = vmatpush2.msra.mxu0 0.0
        %744 = vmatprep.subr.mxu0 0.0
        %745 = vmatpush2.msra.mxu0 0.0
        %746 = vmatprep.subr.mxu0 0.0
        %747 = vmatpush2.msra.mxu0 0.0
        %748 = vmatprep.subr.mxu0 0.0
        %749 = vmatpush2.msra.mxu0 0.0
        %750 = vmatprep.subr.mxu0 0.0
        %751 = vmatpush2.msra.mxu0 0.0
        %752 = vmatprep.subr.mxu0 0.0
        %753 = vmatpush2.msra.mxu0 0.0
        %754 = vmatprep.mubr.f32.mxu0 0.0
        %755 = vmatmul.mubr.f32.gmra.mxu0 %v682
        %v756 = vpop.f32.mrf.mxu0
        %v757 = vadd.f32 0.0, %v756
        %v758 = vpop.f32.mrf.mxu0
        %759 = vmatprep.mubr.f32.mxu0 0.0
        %760 = vmatmul.mubr.f32.gmra.mxu0 %v685
        %v761 = vpop.f32.mrf.mxu0
        %v762 = vadd.f32 0.0, %v761
        %v763 = vpop.f32.mrf.mxu0
        %764 = vdwg.mxu0
        %v765 = vadd.f32 %v593, %v757
        %v766 = vadd.f32 %v594, %v762
        %767 = vmatprep.subr.mxu0 0.0
        %768 = vmatpush1.msra.mxu0 0.0
        %769 = vmatprep.subr.mxu0 0.0
        %770 = vmatpush1.msra.mxu0 0.0
        %771 = vmatprep.subr.mxu0 0.0
        %772 = vmatpush1.msra.mxu0 0.0
        %773 = vmatprep.subr.mxu0 0.0
        %774 = vmatpush1.msra.mxu0 0.0
        %775 = vmatprep.subr.mxu0 0.0
        %776 = vmatpush1.msra.mxu0 0.0
        %777 = vmatprep.subr.mxu0 0.0
        %778 = vmatpush1.msra.mxu0 0.0
        %779 = vmatprep.subr.mxu0 0.0
        %780 = vmatpush1.msra.mxu0 0.0
        %781 = vmatprep.subr.mxu0 0.0
        %782 = vmatpush1.msra.mxu0 0.0
        %783 = vmatprep.subr.mxu0 0.0
        %784 = vmatpush1.msra.mxu0 0.0
        %785 = vmatprep.subr.mxu0 0.0
        %786 = vmatpush1.msra.mxu0 0.0
        %787 = vmatprep.subr.mxu0 0.0
        %788 = vmatpush1.msra.mxu0 0.0
        %789 = vmatprep.subr.mxu0 0.0
        %790 = vmatpush1.msra.mxu0 0.0
        %791 = vmatprep.subr.mxu0 0.0
        %792 = vmatpush1.msra.mxu0 0.0
        %793 = vmatprep.subr.mxu0 0.0
        %794 = vmatpush1.msra.mxu0 0.0
        %795 = vmatprep.subr.mxu0 0.0
        %796 = vmatpush1.msra.mxu0 %v676
        %797 = vmatprep.subr.mxu0 0.0
        %798 = vmatpush1.msra.mxu0 %v671
        %799 = vmatprep.subr.mxu0 0.0
        %800 = vmatpush2.msra.mxu0 0.0
        %801 = vmatprep.subr.mxu0 0.0
        %802 = vmatpush2.msra.mxu0 0.0
        %803 = vmatprep.subr.mxu0 0.0
        %804 = vmatpush2.msra.mxu0 0.0
        %805 = vmatprep.subr.mxu0 0.0
        %806 = vmatpush2.msra.mxu0 0.0
        %807 = vmatprep.subr.mxu0 0.0
        %808 = vmatpush2.msra.mxu0 0.0
        %809 = vmatprep.subr.mxu0 0.0
        %810 = vmatpush2.msra.mxu0 0.0
        %811 = vmatprep.subr.mxu0 0.0
        %812 = vmatpush2.msra.mxu0 0.0
        %813 = vmatprep.subr.mxu0 0.0
        %814 = vmatpush2.msra.mxu0 0.0
        %815 = vmatprep.subr.mxu0 0.0
        %816 = vmatpush2.msra.mxu0 0.0
        %817 = vmatprep.subr.mxu0 0.0
        %818 = vmatpush2.msra.mxu0 0.0
        %819 = vmatprep.subr.mxu0 0.0
        %820 = vmatpush2.msra.mxu0 0.0
        %821 = vmatprep.subr.mxu0 0.0
        %822 = vmatpush2.msra.mxu0 0.0
        %823 = vmatprep.subr.mxu0 0.0
        %824 = vmatpush2.msra.mxu0 0.0
        %825 = vmatprep.subr.mxu0 0.0
        %826 = vmatpush2.msra.mxu0 0.0
        %827 = vmatprep.subr.mxu0 0.0
        %828 = vmatpush2.msra.mxu0 0.0
        %829 = vmatprep.subr.mxu0 0.0
        %830 = vmatpush2.msra.mxu0 0.0
        %831 = vmatprep.mubr.f32.mxu0 0.0
        %832 = vmatmul.mubr.f32.gmra.mxu0 %v599
        %v833 = vpop.f32.mrf.mxu0
        %v834 = vadd.f32 0.0, %v833
        %v835 = vpop.f32.mrf.mxu0
        %836 = vmatprep.mubr.f32.mxu0 0.0
        %837 = vmatmul.mubr.f32.gmra.mxu0 %v602
        %v838 = vpop.f32.mrf.mxu0
        %v839 = vadd.f32 0.0, %v838
        %v840 = vpop.f32.mrf.mxu0
        %841 = vdwg.mxu0
        %v842 = vmul.f32 %v834, 2.0
        %v843 = vmul.f32 %v839, 2.0
        %v844 = vsub.f32 %v842, %v169
        %v845 = vsub.f32 %v843, %v170
        %s846 = scalar_lea.vmem %s2, 16
        %v847 = vld [vmem:[%s846] sm:$0xf]
        %v849 = vsel %vm258, %v844, 0
        %v852 = vsel %vm258, %v845, 0
        %v855 = vsel %vm265, %v847, 0
        %857 = vmatprep.subr.mxu0 0.0
        %858 = vmatpush1.msra.mxu0 0.0
        %859 = vmatprep.subr.mxu0 0.0
        %860 = vmatpush1.msra.mxu0 0.0
        %861 = vmatprep.subr.mxu0 0.0
        %862 = vmatpush1.msra.mxu0 0.0
        %863 = vmatprep.subr.mxu0 0.0
        %864 = vmatpush1.msra.mxu0 0.0
        %865 = vmatprep.subr.mxu0 0.0
        %866 = vmatpush1.msra.mxu0 0.0
        %867 = vmatprep.subr.mxu0 0.0
        %868 = vmatpush1.msra.mxu0 0.0
        %869 = vmatprep.subr.mxu0 0.0
        %870 = vmatpush1.msra.mxu0 0.0
        %871 = vmatprep.subr.mxu0 0.0
        %872 = vmatpush1.msra.mxu0 0.0
        %873 = vmatprep.subr.mxu0 0.0
        %874 = vmatpush1.msra.mxu0 0.0
        %875 = vmatprep.subr.mxu0 0.0
        %876 = vmatpush1.msra.mxu0 0.0
        %877 = vmatprep.subr.mxu0 0.0
        %878 = vmatpush1.msra.mxu0 0.0
        %879 = vmatprep.subr.mxu0 0.0
        %880 = vmatpush1.msra.mxu0 0.0
        %881 = vmatprep.subr.mxu0 0.0
        %882 = vmatpush1.msra.mxu0 0.0
        %883 = vmatprep.subr.mxu0 0.0
        %884 = vmatpush1.msra.mxu0 0.0
        %885 = vmatprep.subr.mxu0 0.0
        %886 = vmatpush1.msra.mxu0 0.0
        %887 = vmatprep.subr.mxu0 0.0
        %888 = vmatpush1.msra.mxu0 %v855
        %889 = vmatprep.subr.mxu0 0.0
        %890 = vmatpush2.msra.mxu0 0.0
        %891 = vmatprep.subr.mxu0 0.0
        %892 = vmatpush2.msra.mxu0 0.0
        %893 = vmatprep.subr.mxu0 0.0
        %894 = vmatpush2.msra.mxu0 0.0
        %895 = vmatprep.subr.mxu0 0.0
        %896 = vmatpush2.msra.mxu0 0.0
        %897 = vmatprep.subr.mxu0 0.0
        %898 = vmatpush2.msra.mxu0 0.0
        %899 = vmatprep.subr.mxu0 0.0
        %900 = vmatpush2.msra.mxu0 0.0
        %901 = vmatprep.subr.mxu0 0.0
        %902 = vmatpush2.msra.mxu0 0.0
        %903 = vmatprep.subr.mxu0 0.0
        %904 = vmatpush2.msra.mxu0 0.0
        %905 = vmatprep.subr.mxu0 0.0
        %906 = vmatpush2.msra.mxu0 0.0
        %907 = vmatprep.subr.mxu0 0.0
        %908 = vmatpush2.msra.mxu0 0.0
        %909 = vmatprep.subr.mxu0 0.0
        %910 = vmatpush2.msra.mxu0 0.0
        %911 = vmatprep.subr.mxu0 0.0
        %912 = vmatpush2.msra.mxu0 0.0
        %913 = vmatprep.subr.mxu0 0.0
        %914 = vmatpush2.msra.mxu0 0.0
        %915 = vmatprep.subr.mxu0 0.0
        %916 = vmatpush2.msra.mxu0 0.0
        %917 = vmatprep.subr.mxu0 0.0
        %918 = vmatpush2.msra.mxu0 0.0
        %919 = vmatprep.subr.mxu0 0.0
        %920 = vmatpush2.msra.mxu0 0.0
        %921 = vmatprep.mubr.f32.mxu0 0.0
        %922 = vmatmul.mubr.f32.gmra.mxu0 %v849
        %v923 = vpop.f32.mrf.mxu0
        %v924 = vadd.f32 0.0, %v923
        %v925 = vpop.f32.mrf.mxu0
        %926 = vmatprep.mubr.f32.mxu0 0.0
        %927 = vmatmul.mubr.f32.gmra.mxu0 %v852
        %v928 = vpop.f32.mrf.mxu0
        %v929 = vadd.f32 0.0, %v928
        %v930 = vpop.f32.mrf.mxu0
        %931 = vdwg.mxu0
        %v932 = vadd.f32 %v765, %v924
        %v933 = vadd.f32 %v766, %v929
        %vm934 = vcmask 261120
        %935 = vst.msk [vmem:[%s163] sm:$0xff] %vm934, %v932
        %936 = vst.msk [vmem:[%s163 + $0x8] sm:$0xff] %vm934, %v933
        %s937 = sand.u32 %s93, 1
        %s938 = scalar_lea.sflag [#allocation3], %s937
        %s939 = sand.u32 %s93, 1
        %s940 = smul.addr %s939, 16
        %s941 = scalar_lea.vmem [#allocation2], %s940
        // Predicated region
        $region33: #{diffusion_graph_convolution.1} parent=31 // pred_check
          %p942 = pneg %p103
        $region34: #{diffusion_graph_convolution.1} parent=31 // pred_check_branch
          %944 = sbr.rel (%p942) target = $region36
        $region35: #{diffusion_graph_convolution.1} parent=31 // pred_region
          %s946 = ssub.s32 256, 256
          %947 = vsyncadd %s938, %s946
          %s948 = smul.addr %s17, 2
          %s949 = smul.addr %s948, 128
          %s950 = scalar_lea.hbm %s3, %s949
          %s951 = sshll.u32 %s941, 4
          %s952 = int_to_ptr.vmem [resolvable:$true] %s951
          %957 = dma.vmem_to_hbm [thread:$0]  %s952, 256, %s950, %s938, 128, 128, 8
        $region36: #{diffusion_graph_convolution.1} parent=31 // pred_fallthru
          _
      $region32: #{diffusion_graph_convolution.1} parent=5 // pred_fallthru
        _
      %p958 = scmp.le.s32.totalorder 2, %s12
      // Predicated region
      $region37: #{diffusion_graph_convolution.1} parent=5 // pred_check
        %p959 = pneg %p958
      $region38: #{diffusion_graph_convolution.1} parent=5 // pred_check_branch
        %961 = sbr.rel (%p959) target = $region40
      $region39: #{diffusion_graph_convolution.1} parent=5 // pred_region
        %s962 = ssub.s32 %s12, 2
        // Predicated region
        $region41: #{diffusion_graph_convolution.1} parent=39 // pred_check
          %p963 = pneg %p109
        $region42: #{diffusion_graph_convolution.1} parent=39 // pred_check_branch
          %965 = sbr.rel (%p963) target = $region44
        $region43: #{diffusion_graph_convolution.1} parent=39 // pred_region
          %s966 = sand.u32 %s94, 1
          %s967 = scalar_lea.sflag [#allocation3], %s966
          %s968 = sand.u32 %s94, 1
          %s969 = smul.addr %s968, 16
          %s970 = scalar_lea.vmem [#allocation2], %s969
          %971 = dma.done %s967, 256
        $region44: #{diffusion_graph_convolution.1} parent=39 // pred_fallthru
          _
      $region40: #{diffusion_graph_convolution.1} parent=5 // pred_fallthru
        _
    $region6: #{diffusion_graph_convolution.1} parent=1 // loop_footer
      %s16 = sadd.s32 1, %s12
    $region7: #{diffusion_graph_convolution.1} parent=1 // loop_footer_branch
      %11 = sbr.rel target = $region3
    $region8: #{diffusion_graph_convolution.1} parent=1 // loop_exit
      _
    %972 = vsyncpa [#allocation3], 1
    %s973 = scalar_lea.sflag [#allocation3], 1
    %974 = vsyncpa %s973, 1

</llo_original>
